<compile_context>
chip_gen: v7x
topology: tpu7x:2x2x1
jax: 0.10.0
libtpu: 0.0.40
codegen_flags: <defaults>
</compile_context>

<pallas_src>
import jax
import jax.numpy as jnp
from jax.experimental import pallas as pl
from jax.experimental.pallas import tpu as pltpu

# ---- model hyperparameters (Custom_CNN_BK defaults) ----
NC = 1          # input channels
HID1 = 32       # hidden_filters_1
KSIZE = 8       # big_kernel_size, used in first layer
ZS = 5          # z_struct_size
NCLS = 10       # n_classes
BN_EPS = 1e-5


def _round_up(a, m):
    return ((a + m - 1) // m) * m


# ---------------------------------------------------------------------------
# Fully fused kernel:
#   conv (flat im2col matmul) + BatchNorm2d(fold) + ReLU + global max pool
#   + Linear(32,5)(+BatchNorm1d fold) + ReLU + Linear(5,10) + Softmax
# ---------------------------------------------------------------------------
def fused_cnn_kernel(p_ref, wc_ref, sc_ref, sh_ref, w1_ref, c1_ref, w2_ref,
                     b2_ref, o_ref):
    # p_ref:  (TN, Ppad, K)  im2col patches, bf16 (Ppad multiple of 16)
    # wc_ref: (K, C)         conv weight flattened & transposed, bf16
    # sc_ref: (1, C)         gamma / sqrt(var + eps)                     (f32)
    # sh_ref: (1, C)         beta + (conv_bias - mean) * scale           (f32)
    # w1_ref: (C, ZS)        fc1 weight pre-scaled by BN1d scale         (f32)
    # c1_ref: (1, ZS)        fc1 bias * scale + BN1d shift               (f32)
    # w2_ref: (ZS, NCLS), b2_ref: (1, NCLS)                              (f32)
    # o_ref:  (TN, NCLS)     softmax probabilities                       (f32)
    tn, pp, k = p_ref.shape
    c = wc_ref.shape[1]

    # Conv2d as ONE flat 2-D MXU matmul (bf16 inputs, f32 accumulation).
    p2d = p_ref[...].reshape(tn * pp, k)                                 # (TN*P, K)
    y = jnp.dot(p2d, wc_ref[...], preferred_element_type=jnp.float32)   # (TN*P, C)

    # Folded conv-bias + BatchNorm2d (eval) + ReLU -- all f32 on the VPU.
    y = jnp.maximum(y * sc_ref[...] + sh_ref[...], 0.0)

    # AdaptiveMaxPool2d((1,1)): max over the patch/spatial axis.
    # (Padded patch rows are edge-replicates of real rows -> max unaffected.)
    g = jnp.max(y.reshape(tn, pp, c), axis=1)                            # (TN, C)

    # Linear(32,5) with bias + BatchNorm1d folded, then ReLU.
    # Dropout(0.4) is identity in eval mode.
    h = jnp.dot(g, w1_ref[...], preferred_element_type=jnp.float32) + c1_ref[...]
    h = jnp.maximum(h, 0.0)

    # Linear(5,10) + stabilized Softmax.  Exact division so each output row
    # sums to 1 up to f32 rounding (approx reciprocal was too coarse).
    logits = jnp.dot(h, w2_ref[...], preferred_element_type=jnp.float32) + b2_ref[...]
    e = jnp.exp(logits - jnp.max(logits, axis=-1, keepdims=True))
    denom = jnp.sum(e, axis=-1, keepdims=True)
    o_ref[...] = e / denom


# ---------------------------------------------------------------------------
# Parameter construction (deterministic, synthetic)
# ---------------------------------------------------------------------------
def init_params(key):
    ks = jax.random.split(key, 12)
    p = {}
    # Conv2d(1, 32, 8x8) with bias (PyTorch default); bias folded into BN shift.
    p['w_conv'] = 0.1 * jax.random.normal(ks[0], (HID1, NC, KSIZE, KSIZE), jnp.float32)
    p['b_conv'] = 0.1 * jax.random.normal(ks[1], (HID1,), jnp.float32)
    # BatchNorm2d(32) running stats + affine
    p['bn2_gamma'] = 1.0 + 0.1 * jax.random.normal(ks[2], (HID1,), jnp.float32)
    p['bn2_beta'] = 0.1 * jax.random.normal(ks[3], (HID1,), jnp.float32)
    p['bn2_mean'] = 0.1 * jax.random.normal(ks[4], (HID1,), jnp.float32)
    p['bn2_var'] = 1.0 + 0.1 * jax.random.uniform(ks[5], (HID1,), jnp.float32)
    # Linear(32, 5) (stored pre-transposed as (in, out))
    p['w_fc1'] = 0.1 * jax.random.normal(ks[6], (HID1, ZS), jnp.float32)
    p['b_fc1'] = 0.1 * jax.random.normal(ks[7], (ZS,), jnp.float32)
    # BatchNorm1d(5)
    p['bn1_gamma'] = 1.0 + 0.1 * jax.random.normal(ks[8], (ZS,), jnp.float32)
    p['bn1_beta'] = 0.1 * jax.random.normal(ks[9], (ZS,), jnp.float32)
    p['bn1_mean'] = 0.1 * jax.random.normal(ks[10], (ZS,), jnp.float32)
    p['bn1_var'] = 1.0 + 0.1 * jax.random.uniform(ks[11], (ZS,), jnp.float32)
    # Linear(5, 10)
    k2a, k2b = jax.random.split(ks[0])
    p['w_fc2'] = 0.1 * jax.random.normal(k2a, (ZS, NCLS), jnp.float32)
    p['b_fc2'] = 0.1 * jax.random.normal(k2b, (NCLS,), jnp.float32)
    return p


def im2col(x_nchw, kh, kw):
    # x: (N, C, H, W) -> patches (N, P, K) with K ordered as (c, i, j)
    N, C, H, W = x_nchw.shape
    OH, OW = H - kh + 1, W - kw + 1
    cols = []
    for i in range(kh):
        for j in range(kw):
            cols.append(x_nchw[:, :, i:i + OH, j:j + OW])
    p = jnp.stack(cols, axis=2)                      # (N, C, kh*kw, OH, OW)
    p = p.reshape(N, C * kh * kw, OH * OW)           # (N, K, P)
    return jnp.transpose(p, (0, 2, 1))               # (N, P, K)


# ---------------------------------------------------------------------------
# Forward wrapper (glue in plain JAX, hot path in one fused Pallas kernel)
# ---------------------------------------------------------------------------
@jax.jit
def custom_cnn_bk_forward(x, params):
    N, C, H, W = x.shape
    assert C == NC
    OH, OW = H - KSIZE + 1, W - KSIZE + 1
    P = OH * OW
    K = C * KSIZE * KSIZE

    patches = im2col(x, KSIZE, KSIZE)                             # (N, P, K) f32

    # Pad P up to a multiple of 16 (bf16 sublane pack) with edge-replicated
    # rows: duplicates cannot change the subsequent max pool.
    P_pad = _round_up(P, 16)
    if P_pad != P:
        patches = jnp.pad(patches, ((0, 0), (0, P_pad - P), (0, 0)), mode='edge')

    # Batch tiling: biggest tile that comfortably fits scoped VMEM on all gens
    # (v7x has 64 MiB physical).  ~64*96*64 bf16 block = 0.75 MiB per buffer.
    TN = min(64, N)
    N_pad = _round_up(N, TN)
    if N_pad != N:
        patches = jnp.pad(patches, ((0, N_pad - N), (0, 0), (0, 0)))

    # bf16 MXU inputs (f32 accumulate); everything pointwise stays f32.
    patches_bf16 = patches.astype(jnp.bfloat16)
    w_conv = params['w_conv'].reshape(HID1, K).T.astype(jnp.bfloat16)   # (K, C)

    # Fold conv bias + BatchNorm2d (eval running stats) into scale/shift.
    scale2 = params['bn2_gamma'] / jnp.sqrt(params['bn2_var'] + BN_EPS)
    shift2 = params['bn2_beta'] + (params['b_conv'] - params['bn2_mean']) * scale2

    # Fold Linear(32,5) bias + BatchNorm1d (eval) into the fc1 weight/shift.
    scale1 = params['bn1_gamma'] / jnp.sqrt(params['bn1_var'] + BN_EPS)
    shift1 = params['bn1_beta'] - params['bn1_mean'] * scale1
    w1f = params['w_fc1'] * scale1[None, :]                             # (32, 5)
    c1 = (params['b_fc1'] * scale1 + shift1)[None, :]                   # (1, 5)

    grid = (N_pad // TN,)
    pred = pl.pallas_call(
        fused_cnn_kernel,
        out_shape=jax.ShapeDtypeStruct((N_pad, NCLS), jnp.float32),
        grid=grid,
        in_specs=[
            pl.BlockSpec((TN, P_pad, K), lambda n: (n, 0, 0)),   # patches (tiled)
            pl.BlockSpec((K, HID1), lambda n: (0, 0)),           # conv weight
            pl.BlockSpec((1, HID1), lambda n: (0, 0)),           # bn2 scale
            pl.BlockSpec((1, HID1), lambda n: (0, 0)),           # bn2 shift
            pl.BlockSpec((HID1, ZS), lambda n: (0, 0)),          # fc1 weight (folded)
            pl.BlockSpec((1, ZS), lambda n: (0, 0)),             # fc1 shift (folded)
            pl.BlockSpec((ZS, NCLS), lambda n: (0, 0)),          # fc2 weight
            pl.BlockSpec((1, NCLS), lambda n: (0, 0)),           # fc2 bias
        ],
        out_specs=pl.BlockSpec((TN, NCLS), lambda n: (n, 0)),
        compiler_params=pltpu.CompilerParams(
            dimension_semantics=("parallel",),
            vmem_limit_bytes=32 * 1024 * 1024,
        ),
    )(patches_bf16, w_conv, scale2[None, :], shift2[None, :], w1f, c1,
      params['w_fc2'], params['b_fc2'][None, :])

    pred = pred[:N]

    # forward() returns a 7-tuple; only `prediction` is computed by default.
    z_struct = None
    return (pred, z_struct, 0, 0, 0, 0, 0)
    # TODO(synk): compute_ratio_batch / compute_var_distance_class paths
    # (use_ratio / loss_min_distance_cl) are host-side per-class stats loops,
    # not implemented as kernels.


# ---------------------------------------------------------------------------
# Pure-JAX (f32) reference for correctness check
# ---------------------------------------------------------------------------
def reference_forward(x, params):
    y = jax.lax.conv_general_dilated(
        x, params['w_conv'], window_strides=(1, 1), padding='VALID',
        dimension_numbers=('NCHW', 'OIHW', 'NCHW'))
    y = y + params['b_conv'][None, :, None, None]
    scale = params['bn2_gamma'] / jnp.sqrt(params['bn2_var'] + BN_EPS)
    y = (y - params['bn2_mean'][None, :, None, None]) * scale[None, :, None, None] \
        + params['bn2_beta'][None, :, None, None]
    y = jnp.maximum(y, 0.0)
    g = jnp.max(y, axis=(2, 3))                                   # (N, 32)
    h = g @ params['w_fc1'] + params['b_fc1']
    s1 = params['bn1_gamma'] / jnp.sqrt(params['bn1_var'] + BN_EPS)
    h = (h - params['bn1_mean']) * s1 + params['bn1_beta']
    h = jnp.maximum(h, 0.0)
    logits = h @ params['w_fc2'] + params['b_fc2']
    return jax.nn.softmax(logits, axis=1)


if __name__ == "__main__":
    key = jax.random.PRNGKey(0)
    kx, kp = jax.random.split(key)
    # Small deterministic input: batch=2, channels=1 (nc=1), spatial=16x16
    x = jax.random.normal(kx, (2, 1, 16, 16), jnp.float32)
    params = init_params(kp)

    pred, *_ = custom_cnn_bk_forward(x, params)
    pred = jax.block_until_ready(pred)

    ref = reference_forward(x, params)
    assert pred.shape == (2, NCLS)
    # Tolerance accounts for bf16 conv inputs (f32 accumulation); observed
    # post-softmax error is ~1e-4.
    assert jnp.allclose(pred, ref, atol=2e-3, rtol=2e-3), "mismatch vs reference"
    assert jnp.allclose(jnp.sum(pred, axis=1), 1.0, atol=1e-3), "softmax not normalized"
    print("KERNEL_OK")
</pallas_src>

<mosaic_0001>
module attributes {stable_mosaic.version = 11 : i64} {
  func.func @fused_cnn_kernel(%arg0: i32, %arg1: memref<2x96x64xbf16, #tpu.memory_space<vmem>>, %arg2: memref<64x32xbf16, #tpu.memory_space<vmem>>, %arg3: memref<1x32xf32, #tpu.memory_space<vmem>>, %arg4: memref<1x32xf32, #tpu.memory_space<vmem>>, %arg5: memref<32x5xf32, #tpu.memory_space<vmem>>, %arg6: memref<1x5xf32, #tpu.memory_space<vmem>>, %arg7: memref<5x10xf32, #tpu.memory_space<vmem>>, %arg8: memref<1x10xf32, #tpu.memory_space<vmem>>, %arg9: memref<2x10xf32, #tpu.memory_space<vmem>>) attributes {dimension_semantics = [#tpu.dimension_semantics<parallel>], iteration_bounds = array<i64: 1>, scalar_prefetch = 0 : i64, scratch_operands = 0 : i64, tpu.core_type = #tpu.core_type<tc>, window_params = [{transform_indices = @transform_0, window_bounds = array<i64: 2, 96, 64>}, {pipeline_mode = #tpu.pipeline_mode<synchronous>, transform_indices = @transform_1, window_bounds = array<i64: 64, 32>}, {pipeline_mode = #tpu.pipeline_mode<synchronous>, transform_indices = @transform_2, window_bounds = array<i64: 1, 32>}, {pipeline_mode = #tpu.pipeline_mode<synchronous>, transform_indices = @transform_3, window_bounds = array<i64: 1, 32>}, {pipeline_mode = #tpu.pipeline_mode<synchronous>, transform_indices = @transform_4, window_bounds = array<i64: 32, 5>}, {pipeline_mode = #tpu.pipeline_mode<synchronous>, transform_indices = @transform_5, window_bounds = array<i64: 1, 5>}, {pipeline_mode = #tpu.pipeline_mode<synchronous>, transform_indices = @transform_6, window_bounds = array<i64: 5, 10>}, {pipeline_mode = #tpu.pipeline_mode<synchronous>, transform_indices = @transform_7, window_bounds = array<i64: 1, 10>}, {transform_indices = @transform_8, window_bounds = array<i64: 2, 10>}]} {
    %c0 = arith.constant 0 : index
    %c0_0 = arith.constant 0 : index
    %c0_1 = arith.constant 0 : index
    %0 = vector.load %arg1[%c0, %c0_0, %c0_1] : memref<2x96x64xbf16, #tpu.memory_space<vmem>>, vector<2x96x64xbf16>
    %1 = vector.shape_cast %0 : vector<2x96x64xbf16> to vector<192x64xbf16>
    %c0_2 = arith.constant 0 : index
    %c0_3 = arith.constant 0 : index
    %2 = vector.load %arg2[%c0_2, %c0_3] : memref<64x32xbf16, #tpu.memory_space<vmem>>, vector<64x32xbf16>
    %cst = arith.constant dense<0.000000e+00> : vector<192x32xf32>
    %3 = tpu.matmul %1, %2, %cst {dimension_numbers = #tpu.dot_dimension_numbers<[1], [0], [0], [1], [0, 0, 1, 1], [], []>} : vector<192x64xbf16>, vector<64x32xbf16>, vector<192x32xf32> -> vector<192x32xf32>
    %c0_4 = arith.constant 0 : index
    %c0_5 = arith.constant 0 : index
    %4 = vector.load %arg3[%c0_4, %c0_5] : memref<1x32xf32, #tpu.memory_space<vmem>>, vector<1x32xf32>
    %5 = vector.broadcast %4 : vector<1x32xf32> to vector<192x32xf32>
    %6 = arith.mulf %3, %5 : vector<192x32xf32>
    %c0_6 = arith.constant 0 : index
    %c0_7 = arith.constant 0 : index
    %7 = vector.load %arg4[%c0_6, %c0_7] : memref<1x32xf32, #tpu.memory_space<vmem>>, vector<1x32xf32>
    %8 = vector.broadcast %7 : vector<1x32xf32> to vector<192x32xf32>
    %9 = arith.addf %6, %8 : vector<192x32xf32>
    %cst_8 = arith.constant 0.000000e+00 : f32
    %10 = vector.broadcast %cst_8 : f32 to vector<192x32xf32>
    %11 = arith.maximumf %9, %10 : vector<192x32xf32>
    %12 = vector.shape_cast %11 : vector<192x32xf32> to vector<2x96x32xf32>
    %cst_9 = arith.constant dense<0xFF800000> : vector<2x32xf32>
    %13 = vector.multi_reduction <maximumf>, %12, %cst_9 [1] : vector<2x96x32xf32> to vector<2x32xf32>
    %c0_10 = arith.constant 0 : index
    %c0_11 = arith.constant 0 : index
    %14 = vector.load %arg5[%c0_10, %c0_11] : memref<32x5xf32, #tpu.memory_space<vmem>>, vector<32x5xf32>
    %cst_12 = arith.constant dense<0.000000e+00> : vector<2x5xf32>
    %15 = tpu.matmul %13, %14, %cst_12 {dimension_numbers = #tpu.dot_dimension_numbers<[1], [0], [0], [1], [0, 0, 1, 1], [], []>} : vector<2x32xf32>, vector<32x5xf32>, vector<2x5xf32> -> vector<2x5xf32>
    %c0_13 = arith.constant 0 : index
    %c0_14 = arith.constant 0 : index
    %16 = vector.load %arg6[%c0_13, %c0_14] : memref<1x5xf32, #tpu.memory_space<vmem>>, vector<1x5xf32>
    %17 = vector.broadcast %16 : vector<1x5xf32> to vector<2x5xf32>
    %18 = arith.addf %15, %17 : vector<2x5xf32>
    %cst_15 = arith.constant 0.000000e+00 : f32
    %19 = vector.broadcast %cst_15 : f32 to vector<2x5xf32>
    %20 = arith.maximumf %18, %19 : vector<2x5xf32>
    %c0_16 = arith.constant 0 : index
    %c0_17 = arith.constant 0 : index
    %21 = vector.load %arg7[%c0_16, %c0_17] : memref<5x10xf32, #tpu.memory_space<vmem>>, vector<5x10xf32>
    %cst_18 = arith.constant dense<0.000000e+00> : vector<2x10xf32>
    %22 = tpu.matmul %20, %21, %cst_18 {dimension_numbers = #tpu.dot_dimension_numbers<[1], [0], [0], [1], [0, 0, 1, 1], [], []>} : vector<2x5xf32>, vector<5x10xf32>, vector<2x10xf32> -> vector<2x10xf32>
    %c0_19 = arith.constant 0 : index
    %c0_20 = arith.constant 0 : index
    %23 = vector.load %arg8[%c0_19, %c0_20] : memref<1x10xf32, #tpu.memory_space<vmem>>, vector<1x10xf32>
    %24 = vector.broadcast %23 : vector<1x10xf32> to vector<2x10xf32>
    %25 = arith.addf %22, %24 : vector<2x10xf32>
    %cst_21 = arith.constant dense<0xFF800000> : vector<2xf32>
    %26 = vector.multi_reduction <maximumf>, %25, %cst_21 [1] : vector<2x10xf32> to vector<2xf32>
    %27 = vector.shape_cast %26 : vector<2xf32> to vector<2x1xf32>
    %28 = vector.broadcast %27 : vector<2x1xf32> to vector<2x10xf32>
    %29 = arith.subf %25, %28 : vector<2x10xf32>
    %30 = math.exp %29 : vector<2x10xf32>
    %cst_22 = arith.constant dense<0.000000e+00> : vector<2xf32>
    %31 = vector.multi_reduction <add>, %30, %cst_22 [1] : vector<2x10xf32> to vector<2xf32>
    %32 = vector.shape_cast %31 : vector<2xf32> to vector<2x1xf32>
    %33 = vector.broadcast %32 : vector<2x1xf32> to vector<2x10xf32>
    %34 = arith.divf %30, %33 : vector<2x10xf32>
    %c0_23 = arith.constant 0 : index
    %c0_24 = arith.constant 0 : index
    %35 = vector.load %arg9[%c0_23, %c0_24] : memref<2x10xf32, #tpu.memory_space<vmem>>, vector<2x10xf32>
    tpu.vector_store %arg9[%c0_23, %c0_24], %34 {strides = array<i32>} : memref<2x10xf32, #tpu.memory_space<vmem>>, vector<2x10xf32>,
    return
  }
  func.func @transform_0(%arg0: i32) -> (i32, i32, i32) {
    %c0_i32 = arith.constant 0 : i32
    %c0_i32_0 = arith.constant 0 : i32
    %c0_i32_1 = arith.constant 0 : i32
    return %arg0, %c0_i32, %c0_i32_0 : i32, i32, i32
  }
  func.func @transform_1(%arg0: i32) -> (i32, i32) {
    %c0_i32 = arith.constant 0 : i32
    %c0_i32_0 = arith.constant 0 : i32
    %c0_i32_1 = arith.constant 0 : i32
    return %c0_i32, %c0_i32_0 : i32, i32
  }
  func.func @transform_2(%arg0: i32) -> (i32, i32) {
    %c0_i32 = arith.constant 0 : i32
    %c0_i32_0 = arith.constant 0 : i32
    %c0_i32_1 = arith.constant 0 : i32
    return %c0_i32, %c0_i32_0 : i32, i32
  }
  func.func @transform_3(%arg0: i32) -> (i32, i32) {
    %c0_i32 = arith.constant 0 : i32
    %c0_i32_0 = arith.constant 0 : i32
    %c0_i32_1 = arith.constant 0 : i32
    return %c0_i32, %c0_i32_0 : i32, i32
  }
  func.func @transform_4(%arg0: i32) -> (i32, i32) {
    %c0_i32 = arith.constant 0 : i32
    %c0_i32_0 = arith.constant 0 : i32
    %c0_i32_1 = arith.constant 0 : i32
    return %c0_i32, %c0_i32_0 : i32, i32
  }
  func.func @transform_5(%arg0: i32) -> (i32, i32) {
    %c0_i32 = arith.constant 0 : i32
    %c0_i32_0 = arith.constant 0 : i32
    %c0_i32_1 = arith.constant 0 : i32
    return %c0_i32, %c0_i32_0 : i32, i32
  }
  func.func @transform_6(%arg0: i32) -> (i32, i32) {
    %c0_i32 = arith.constant 0 : i32
    %c0_i32_0 = arith.constant 0 : i32
    %c0_i32_1 = arith.constant 0 : i32
    return %c0_i32, %c0_i32_0 : i32, i32
  }
  func.func @transform_7(%arg0: i32) -> (i32, i32) {
    %c0_i32 = arith.constant 0 : i32
    %c0_i32_0 = arith.constant 0 : i32
    %c0_i32_1 = arith.constant 0 : i32
    return %c0_i32, %c0_i32_0 : i32, i32
  }
  func.func @transform_8(%arg0: i32) -> (i32, i32) {
    %c0_i32 = arith.constant 0 : i32
    %c0_i32_0 = arith.constant 0 : i32
    return %arg0, %c0_i32 : i32, i32
  }
}

</mosaic_0001>

<llo_original>
// kernel: custom_cnn_bk_forward.1
$region0: #{custom_cnn_bk_forward.1}
  #allocation0 [shape = 'u32[]', space=smem, size = 0x4, offset = 0x4, fixed_abs, tag = 'smem constant byte address 0x4 - core index']
  #allocation1 [shape = 'u32[144,128]{1,0:T(1,128)}', space=vmem, size = 0x12000, scoped, tag = 'internal scratch']
  %s0 = inlined_call_operand.vmem [shape: bf16[2,96,64], index: 0, kind: input, shape index: {}]
  %s1 = inlined_call_operand.vmem [shape: bf16[64,32], index: 1, kind: input, shape index: {}]
  %s2 = inlined_call_operand.vmem [shape: f32[1,32], index: 2, kind: input, shape index: {}]
  %s3 = inlined_call_operand.vmem [shape: f32[1,32], index: 3, kind: input, shape index: {}]
  %s4 = inlined_call_operand.vmem [shape: f32[32,5], index: 4, kind: input, shape index: {}]
  %s5 = inlined_call_operand.vmem [shape: f32[1,5], index: 5, kind: input, shape index: {}]
  %s6 = inlined_call_operand.vmem [shape: f32[5,10], index: 6, kind: input, shape index: {}]
  %s7 = inlined_call_operand.vmem [shape: f32[1,10], index: 7, kind: input, shape index: {}]
  %s8 = inlined_call_operand.hbm [shape: f32[2,10], index: 8, kind: output, shape index: {}]
  %s9 = sld [smem:[#allocation0]]
  $region42: #{custom_cnn_bk_forward.1} parent=0
    _
  %s11 = ssub.s32 1, %s9
  %s12 = scalar_select 0, %s11, %s9
  $region1: #{custom_cnn_bk_forward.1} parent=0
    #allocation2 [shape = 'u8[1024]{0}', space=vmem, size = 0x400, scoped, tag = 'output window, operand 0, single buffered']
    #allocation3 [shape = 's32[1]{0}', space=sflag, size = 0x4, scoped, tag = 'scoped memory for custom_cnn_bk_forward.1']
    %13 = vsyncpa [#allocation3], 0
    // Predicated region
    $region2: #{custom_cnn_bk_forward.1} parent=1 // pred_check
      _
    $region3: #{custom_cnn_bk_forward.1} parent=1 // pred_check_branch
      %15 = sbr.rel (0) target = $region5
    $region4: #{custom_cnn_bk_forward.1} parent=1 // pred_region
      _
    $region5: #{custom_cnn_bk_forward.1} parent=1 // pred_fallthru
      _
    // Predicated region
    $region6: #{custom_cnn_bk_forward.1} parent=1 // pred_check
      _
    $region7: #{custom_cnn_bk_forward.1} parent=1 // pred_check_branch
      %17 = sbr.rel (0) target = $region9
    $region8: #{custom_cnn_bk_forward.1} parent=1 // pred_region
      _
    $region9: #{custom_cnn_bk_forward.1} parent=1 // pred_fallthru
      _
    // Predicated region
    $region10: #{custom_cnn_bk_forward.1} parent=1 // pred_check
      _
    $region11: #{custom_cnn_bk_forward.1} parent=1 // pred_check_branch
      %19 = sbr.rel (0) target = $region13
    $region12: #{custom_cnn_bk_forward.1} parent=1 // pred_region
      _
    $region13: #{custom_cnn_bk_forward.1} parent=1 // pred_fallthru
      _
    // Predicated region
    $region14: #{custom_cnn_bk_forward.1} parent=1 // pred_check
      _
    $region15: #{custom_cnn_bk_forward.1} parent=1 // pred_check_branch
      %21 = sbr.rel (0) target = $region17
    $region16: #{custom_cnn_bk_forward.1} parent=1 // pred_region
      _
    $region17: #{custom_cnn_bk_forward.1} parent=1 // pred_fallthru
      _
    // Predicated region
    $region18: #{custom_cnn_bk_forward.1} parent=1 // pred_check
      _
    $region19: #{custom_cnn_bk_forward.1} parent=1 // pred_check_branch
      %23 = sbr.rel (0) target = $region21
    $region20: #{custom_cnn_bk_forward.1} parent=1 // pred_region
      _
    $region21: #{custom_cnn_bk_forward.1} parent=1 // pred_fallthru
      _
    // Predicated region
    $region22: #{custom_cnn_bk_forward.1} parent=1 // pred_check
      _
    $region23: #{custom_cnn_bk_forward.1} parent=1 // pred_check_branch
      %25 = sbr.rel (0) target = $region25
    $region24: #{custom_cnn_bk_forward.1} parent=1 // pred_region
      _
    $region25: #{custom_cnn_bk_forward.1} parent=1 // pred_fallthru
      _
    // Predicated region
    $region26: #{custom_cnn_bk_forward.1} parent=1 // pred_check
      _
    $region27: #{custom_cnn_bk_forward.1} parent=1 // pred_check_branch
      %27 = sbr.rel (0) target = $region29
    $region28: #{custom_cnn_bk_forward.1} parent=1 // pred_region
      _
    $region29: #{custom_cnn_bk_forward.1} parent=1 // pred_fallthru
      _
    // Predicated region
    $region30: #{custom_cnn_bk_forward.1} parent=1 // pred_check
      _
    $region31: #{custom_cnn_bk_forward.1} parent=1 // pred_check_branch
      %29 = sbr.rel (0) target = $region33
    $region32: #{custom_cnn_bk_forward.1} parent=1 // pred_region
      _
    $region33: #{custom_cnn_bk_forward.1} parent=1 // pred_fallthru
      _
    %v31 = vld [vmem:[%s0] sm:$0xf]
    %v32 = vld [vmem:[%s0 + $0x4] sm:$0xf]
    %v33 = vld [vmem:[%s0 + $0x8] sm:$0xf]
    %v34 = vld [vmem:[%s0 + $0xc] sm:$0xf]
    %v35 = vld [vmem:[%s0 + $0x10] sm:$0xf]
    %v36 = vld [vmem:[%s0 + $0x14] sm:$0xf]
    %v37 = vld [vmem:[%s0 + $0x18] sm:$0xf]
    %v38 = vld [vmem:[%s0 + $0x1c] sm:$0xf]
    %v39 = vld [vmem:[%s0 + $0x20] sm:$0xf]
    %v40 = vld [vmem:[%s0 + $0x24] sm:$0xf]
    %v41 = vld [vmem:[%s0 + $0x28] sm:$0xf]
    %v42 = vld [vmem:[%s0 + $0x2c] sm:$0xf]
    %v43 = vld [vmem:[%s0 + $0x30] sm:$0xf]
    %v44 = vld [vmem:[%s0 + $0x34] sm:$0xf]
    %v45 = vld [vmem:[%s0 + $0x38] sm:$0xf]
    %v46 = vld [vmem:[%s0 + $0x3c] sm:$0xf]
    %v47 = vld [vmem:[%s0 + $0x40] sm:$0xf]
    %v48 = vld [vmem:[%s0 + $0x44] sm:$0xf]
    %v49 = vld [vmem:[%s0 + $0x48] sm:$0xf]
    %v50 = vld [vmem:[%s0 + $0x4c] sm:$0xf]
    %v51 = vld [vmem:[%s0 + $0x50] sm:$0xf]
    %v52 = vld [vmem:[%s0 + $0x54] sm:$0xf]
    %v53 = vld [vmem:[%s0 + $0x58] sm:$0xf]
    %v54 = vld [vmem:[%s0 + $0x5c] sm:$0xf]
    %v55 = vld [vmem:[%s1] sm:$0xf]
    %v56 = vld [vmem:[%s1 + $0x4] sm:$0xf]
    %v57 = vld [vmem:[%s1 + $0x8] sm:$0xf]
    %v58 = vld [vmem:[%s1 + $0xc] sm:$0xf]
    %v59 = vld [vmem:[%s1 + $0x10] sm:$0xf]
    %v60 = vld [vmem:[%s1 + $0x14] sm:$0xf]
    %v61 = vld [vmem:[%s1 + $0x18] sm:$0xf]
    %v62 = vld [vmem:[%s1 + $0x1c] sm:$0xf]
    %v87 = vunpack.c.l.b16 %v31
    %v88 = vunpack.c.l.b16 %v32
    %v89 = vunpack.c.l.b16 %v33
    %v90 = vunpack.c.l.b16 %v34
    %v91 = vunpack.c.l.b16 %v35
    %v92 = vunpack.c.l.b16 %v36
    %v93 = vunpack.c.l.b16 %v37
    %v94 = vunpack.c.l.b16 %v38
    %v95 = vunpack.c.l.b16 %v39
    %v96 = vunpack.c.l.b16 %v40
    %v97 = vunpack.c.l.b16 %v41
    %v98 = vunpack.c.l.b16 %v42
    %v99 = vunpack.c.l.b16 %v43
    %v100 = vunpack.c.l.b16 %v44
    %v101 = vunpack.c.l.b16 %v45
    %v102 = vunpack.c.l.b16 %v46
    %v103 = vunpack.c.l.b16 %v47
    %v104 = vunpack.c.l.b16 %v48
    %v105 = vunpack.c.l.b16 %v49
    %v106 = vunpack.c.l.b16 %v50
    %v107 = vunpack.c.l.b16 %v51
    %v108 = vunpack.c.l.b16 %v52
    %v109 = vunpack.c.l.b16 %v53
    %v110 = vunpack.c.l.b16 %v54
    %v111 = vpack.c.b16 %v88, %v87
    %v112 = vpack.c.b16 %v90, %v89
    %v113 = vpack.c.b16 %v92, %v91
    %v114 = vpack.c.b16 %v94, %v93
    %v115 = vpack.c.b16 %v96, %v95
    %v116 = vpack.c.b16 %v98, %v97
    %v117 = vpack.c.b16 %v100, %v99
    %v118 = vpack.c.b16 %v102, %v101
    %v119 = vpack.c.b16 %v104, %v103
    %v120 = vpack.c.b16 %v106, %v105
    %v121 = vpack.c.b16 %v108, %v107
    %v122 = vpack.c.b16 %v110, %v109
    %v131 = vunpack.c.l.b16 %v55
    %v132 = vunpack.c.l.b16 %v56
    %v133 = vunpack.c.l.b16 %v57
    %v134 = vunpack.c.l.b16 %v58
    %v135 = vunpack.c.l.b16 %v59
    %v136 = vunpack.c.l.b16 %v60
    %v137 = vunpack.c.l.b16 %v61
    %v138 = vunpack.c.l.b16 %v62
    %v139 = vpack.c.b16 %v132, %v131
    %v140 = vpack.c.b16 %v134, %v133
    %v141 = vpack.c.b16 %v136, %v135
    %v142 = vpack.c.b16 %v138, %v137
    %vm147 = vcmask 523264
    %v149 = vsel %vm147, %v111, 0
    %v152 = vsel %vm147, %v112, 0
    %v155 = vsel %vm147, %v113, 0
    %v158 = vsel %vm147, %v114, 0
    %v161 = vsel %vm147, %v115, 0
    %v164 = vsel %vm147, %v116, 0
    %v167 = vsel %vm147, %v117, 0
    %v170 = vsel %vm147, %v118, 0
    %v173 = vsel %vm147, %v119, 0
    %v176 = vsel %vm147, %v120, 0
    %v179 = vsel %vm147, %v121, 0
    %v182 = vsel %vm147, %v122, 0
    %184 = vmatprep.subr.bf16.mxu0 0
    %185 = vmatpush1.bf16.msra.mxu0 %v139
    %186 = vmatprep.subr.bf16.mxu0 0
    %187 = vmatpush1.bf16.msra.mxu0 %v140
    %188 = vmatprep.subr.bf16.mxu0 0
    %189 = vmatpush1.bf16.msra.mxu0 %v141
    %190 = vmatprep.subr.bf16.mxu0 0
    %191 = vmatpush1.bf16.msra.mxu0 %v142
    %192 = vmatprep.subr.bf16.mxu0 0
    %193 = vmatpush1.bf16.msra.mxu0 0
    %194 = vmatprep.subr.bf16.mxu0 0
    %195 = vmatpush1.bf16.msra.mxu0 0
    %196 = vmatprep.subr.bf16.mxu0 0
    %197 = vmatpush1.bf16.msra.mxu0 0
    %198 = vmatprep.subr.bf16.mxu0 0
    %199 = vmatpush1.bf16.msra.mxu0 0
    %200 = vmatprep.subr.bf16.mxu0 0
    %201 = vmatpush1.bf16.msra.mxu0 0
    %202 = vmatprep.subr.bf16.mxu0 0
    %203 = vmatpush1.bf16.msra.mxu0 0
    %204 = vmatprep.subr.bf16.mxu0 0
    %205 = vmatpush1.bf16.msra.mxu0 0
    %206 = vmatprep.subr.bf16.mxu0 0
    %207 = vmatpush1.bf16.msra.mxu0 0
    %208 = vmatprep.subr.bf16.mxu0 0
    %209 = vmatpush1.bf16.msra.mxu0 0
    %210 = vmatprep.subr.bf16.mxu0 0
    %211 = vmatpush1.bf16.msra.mxu0 0
    %212 = vmatprep.subr.bf16.mxu0 0
    %213 = vmatpush1.bf16.msra.mxu0 0
    %214 = vmatprep.subr.bf16.mxu0 0
    %215 = vmatpush1.bf16.msra.mxu0 0
    %216 = vmatprep.mubr.bf16.mxu0 0
    %217 = vmatmul.mubr.bf16.gmra.mrb[0].mxu0 %v149
    %v218 = vpop.f32.mrb[0].mxu0
    %v219 = vadd.f32 0.0, %v218
    %v220 = vpop.f32.mrb[0].mxu0
    %v221 = vpop.f32.mrb[0].mxu0
    %v222 = vadd.f32 0.0, %v221
    %v223 = vpop.f32.mrb[0].mxu0
    %224 = vmatprep.mubr.bf16.mxu0 0
    %225 = vmatmul.mubr.bf16.gmra.mrb[0].mxu0 %v152
    %v226 = vpop.f32.mrb[0].mxu0
    %v227 = vadd.f32 0.0, %v226
    %v228 = vpop.f32.mrb[0].mxu0
    %v229 = vpop.f32.mrb[0].mxu0
    %v230 = vadd.f32 0.0, %v229
    %v231 = vpop.f32.mrb[0].mxu0
    %232 = vmatprep.mubr.bf16.mxu0 0
    %233 = vmatmul.mubr.bf16.gmra.mrb[0].mxu0 %v155
    %v234 = vpop.f32.mrb[0].mxu0
    %v235 = vadd.f32 0.0, %v234
    %v236 = vpop.f32.mrb[0].mxu0
    %v237 = vpop.f32.mrb[0].mxu0
    %v238 = vadd.f32 0.0, %v237
    %v239 = vpop.f32.mrb[0].mxu0
    %240 = vmatprep.mubr.bf16.mxu0 0
    %241 = vmatmul.mubr.bf16.gmra.mrb[0].mxu0 %v158
    %v242 = vpop.f32.mrb[0].mxu0
    %v243 = vadd.f32 0.0, %v242
    %v244 = vpop.f32.mrb[0].mxu0
    %v245 = vpop.f32.mrb[0].mxu0
    %v246 = vadd.f32 0.0, %v245
    %v247 = vpop.f32.mrb[0].mxu0
    %248 = vmatprep.mubr.bf16.mxu0 0
    %249 = vmatmul.mubr.bf16.gmra.mrb[0].mxu0 %v161
    %v250 = vpop.f32.mrb[0].mxu0
    %v251 = vadd.f32 0.0, %v250
    %v252 = vpop.f32.mrb[0].mxu0
    %v253 = vpop.f32.mrb[0].mxu0
    %v254 = vadd.f32 0.0, %v253
    %v255 = vpop.f32.mrb[0].mxu0
    %256 = vmatprep.mubr.bf16.mxu0 0
    %257 = vmatmul.mubr.bf16.gmra.mrb[0].mxu0 %v164
    %v258 = vpop.f32.mrb[0].mxu0
    %v259 = vadd.f32 0.0, %v258
    %v260 = vpop.f32.mrb[0].mxu0
    %v261 = vpop.f32.mrb[0].mxu0
    %v262 = vadd.f32 0.0, %v261
    %v263 = vpop.f32.mrb[0].mxu0
    %264 = vmatprep.mubr.bf16.mxu0 0
    %265 = vmatmul.mubr.bf16.gmra.mrb[0].mxu0 %v167
    %v266 = vpop.f32.mrb[0].mxu0
    %v267 = vadd.f32 0.0, %v266
    %v268 = vpop.f32.mrb[0].mxu0
    %v269 = vpop.f32.mrb[0].mxu0
    %v270 = vadd.f32 0.0, %v269
    %v271 = vpop.f32.mrb[0].mxu0
    %272 = vmatprep.mubr.bf16.mxu0 0
    %273 = vmatmul.mubr.bf16.gmra.mrb[0].mxu0 %v170
    %v274 = vpop.f32.mrb[0].mxu0
    %v275 = vadd.f32 0.0, %v274
    %v276 = vpop.f32.mrb[0].mxu0
    %v277 = vpop.f32.mrb[0].mxu0
    %v278 = vadd.f32 0.0, %v277
    %v279 = vpop.f32.mrb[0].mxu0
    %280 = vmatprep.mubr.bf16.mxu0 0
    %281 = vmatmul.mubr.bf16.gmra.mrb[0].mxu0 %v173
    %v282 = vpop.f32.mrb[0].mxu0
    %v283 = vadd.f32 0.0, %v282
    %v284 = vpop.f32.mrb[0].mxu0
    %v285 = vpop.f32.mrb[0].mxu0
    %v286 = vadd.f32 0.0, %v285
    %v287 = vpop.f32.mrb[0].mxu0
    %288 = vmatprep.mubr.bf16.mxu0 0
    %289 = vmatmul.mubr.bf16.gmra.mrb[0].mxu0 %v176
    %v290 = vpop.f32.mrb[0].mxu0
    %v291 = vadd.f32 0.0, %v290
    %v292 = vpop.f32.mrb[0].mxu0
    %v293 = vpop.f32.mrb[0].mxu0
    %v294 = vadd.f32 0.0, %v293
    %v295 = vpop.f32.mrb[0].mxu0
    %296 = vmatprep.mubr.bf16.mxu0 0
    %297 = vmatmul.mubr.bf16.gmra.mrb[0].mxu0 %v179
    %v298 = vpop.f32.mrb[0].mxu0
    %v299 = vadd.f32 0.0, %v298
    %v300 = vpop.f32.mrb[0].mxu0
    %v301 = vpop.f32.mrb[0].mxu0
    %v302 = vadd.f32 0.0, %v301
    %v303 = vpop.f32.mrb[0].mxu0
    %304 = vmatprep.mubr.bf16.mxu0 0
    %305 = vmatmul.mubr.bf16.gmra.mrb[0].mxu0 %v182
    %v306 = vpop.f32.mrb[0].mxu0
    %v307 = vadd.f32 0.0, %v306
    %v308 = vpop.f32.mrb[0].mxu0
    %v309 = vpop.f32.mrb[0].mxu0
    %v310 = vadd.f32 0.0, %v309
    %v311 = vpop.f32.mrb[0].mxu0
    %312 = vdwg.mxu0
    %v313 = vld [vmem:[%s2] sm:$0x1]
    %v315 = vlaneseq
    %v316 = vshrl.u32 %v315, 7
    %v317 = vsub.s32 0, %v316
    %v318 = vrot.slane %v313, %v317
    %v320 = vmul.f32 %v219, %v318
    %v321 = vmul.f32 %v222, %v318
    %v322 = vmul.f32 %v227, %v318
    %v323 = vmul.f32 %v230, %v318
    %v324 = vmul.f32 %v235, %v318
    %v325 = vmul.f32 %v238, %v318
    %v326 = vmul.f32 %v243, %v318
    %v327 = vmul.f32 %v246, %v318
    %v328 = vmul.f32 %v251, %v318
    %v329 = vmul.f32 %v254, %v318
    %v330 = vmul.f32 %v259, %v318
    %v331 = vmul.f32 %v262, %v318
    %v332 = vmul.f32 %v267, %v318
    %v333 = vmul.f32 %v270, %v318
    %v334 = vmul.f32 %v275, %v318
    %v335 = vmul.f32 %v278, %v318
    %v336 = vmul.f32 %v283, %v318
    %v337 = vmul.f32 %v286, %v318
    %v338 = vmul.f32 %v291, %v318
    %v339 = vmul.f32 %v294, %v318
    %v340 = vmul.f32 %v299, %v318
    %v341 = vmul.f32 %v302, %v318
    %v342 = vmul.f32 %v307, %v318
    %v343 = vmul.f32 %v310, %v318
    %v344 = vld [vmem:[%s3] sm:$0x1]
    %v346 = vlaneseq
    %v347 = vshrl.u32 %v346, 7
    %v348 = vsub.s32 0, %v347
    %v349 = vrot.slane %v344, %v348
    %v351 = vadd.f32 %v320, %v349
    %v352 = vadd.f32 %v321, %v349
    %v353 = vadd.f32 %v322, %v349
    %v354 = vadd.f32 %v323, %v349
    %v355 = vadd.f32 %v324, %v349
    %v356 = vadd.f32 %v325, %v349
    %v357 = vadd.f32 %v326, %v349
    %v358 = vadd.f32 %v327, %v349
    %v359 = vadd.f32 %v328, %v349
    %v360 = vadd.f32 %v329, %v349
    %v361 = vadd.f32 %v330, %v349
    %v362 = vadd.f32 %v331, %v349
    %v363 = vadd.f32 %v332, %v349
    %v364 = vadd.f32 %v333, %v349
    %v365 = vadd.f32 %v334, %v349
    %v366 = vadd.f32 %v335, %v349
    %v367 = vadd.f32 %v336, %v349
    %v368 = vadd.f32 %v337, %v349
    %v369 = vadd.f32 %v338, %v349
    %v370 = vadd.f32 %v339, %v349
    %v371 = vadd.f32 %v340, %v349
    %v372 = vadd.f32 %v341, %v349
    %v373 = vadd.f32 %v342, %v349
    %v374 = vadd.f32 %v343, %v349
    %v375 = vmax.f32 %v351, 0.0
    %v376 = vmax.f32 %v352, 0.0
    %v377 = vmax.f32 %v353, 0.0
    %v378 = vmax.f32 %v354, 0.0
    %v379 = vmax.f32 %v355, 0.0
    %v380 = vmax.f32 %v356, 0.0
    %v381 = vmax.f32 %v357, 0.0
    %v382 = vmax.f32 %v358, 0.0
    %v383 = vmax.f32 %v359, 0.0
    %v384 = vmax.f32 %v360, 0.0
    %v385 = vmax.f32 %v361, 0.0
    %v386 = vmax.f32 %v362, 0.0
    %v387 = vmax.f32 %v363, 0.0
    %v388 = vmax.f32 %v364, 0.0
    %v389 = vmax.f32 %v365, 0.0
    %v390 = vmax.f32 %v366, 0.0
    %v391 = vmax.f32 %v367, 0.0
    %v392 = vmax.f32 %v368, 0.0
    %v393 = vmax.f32 %v369, 0.0
    %v394 = vmax.f32 %v370, 0.0
    %v395 = vmax.f32 %v371, 0.0
    %v396 = vmax.f32 %v372, 0.0
    %v397 = vmax.f32 %v373, 0.0
    %v398 = vmax.f32 %v374, 0.0
    %vm399 = vcmask 261120
    %v400 = vsel %vm399, %v375, -inf
    %v401 = vsel %vm399, %v376, -inf
    %v402 = vsel %vm399, %v377, -inf
    %v403 = vmax.f32 %v400, %v402
    %v404 = vsel %vm399, %v378, -inf
    %v405 = vmax.f32 %v401, %v404
    %v406 = vsel %vm399, %v379, -inf
    %v407 = vmax.f32 %v403, %v406
    %v408 = vsel %vm399, %v380, -inf
    %v409 = vmax.f32 %v405, %v408
    %v410 = vsel %vm399, %v381, -inf
    %v411 = vmax.f32 %v407, %v410
    %v412 = vsel %vm399, %v382, -inf
    %v413 = vmax.f32 %v409, %v412
    %v414 = vsel %vm399, %v383, -inf
    %v415 = vmax.f32 %v411, %v414
    %v416 = vsel %vm399, %v384, -inf
    %v417 = vmax.f32 %v413, %v416
    %v418 = vsel %vm399, %v385, -inf
    %v419 = vmax.f32 %v415, %v418
    %v420 = vsel %vm399, %v386, -inf
    %v421 = vmax.f32 %v417, %v420
    %v422 = vmax.f32 %v419, %v421
    %v423 = vrot.slane %v422, 4
    %v424 = vmax.f32 %v422, %v423
    %v425 = vrot.slane %v424, 2
    %v426 = vmax.f32 %v424, %v425
    %v427 = vrot.slane %v426, 1
    %v428 = vmax.f32 %v426, %v427
    %v429 = vsel %vm399, %v387, -inf
    %v430 = vsel %vm399, %v388, -inf
    %v431 = vsel %vm399, %v389, -inf
    %v432 = vmax.f32 %v429, %v431
    %v433 = vsel %vm399, %v390, -inf
    %v434 = vmax.f32 %v430, %v433
    %v435 = vsel %vm399, %v391, -inf
    %v436 = vmax.f32 %v432, %v435
    %v437 = vsel %vm399, %v392, -inf
    %v438 = vmax.f32 %v434, %v437
    %v439 = vsel %vm399, %v393, -inf
    %v440 = vmax.f32 %v436, %v439
    %v441 = vsel %vm399, %v394, -inf
    %v442 = vmax.f32 %v438, %v441
    %v443 = vsel %vm399, %v395, -inf
    %v444 = vmax.f32 %v440, %v443
    %v445 = vsel %vm399, %v396, -inf
    %v446 = vmax.f32 %v442, %v445
    %v447 = vsel %vm399, %v397, -inf
    %v448 = vmax.f32 %v444, %v447
    %v449 = vsel %vm399, %v398, -inf
    %v450 = vmax.f32 %v446, %v449
    %v451 = vmax.f32 %v448, %v450
    %v452 = vrot.slane %v451, 4
    %v453 = vmax.f32 %v451, %v452
    %v454 = vrot.slane %v453, 2
    %v455 = vmax.f32 %v453, %v454
    %v456 = vrot.slane %v455, 1
    %v457 = vmax.f32 %v455, %v456
    %v458 = vld [vmem:[%s4] sm:$0xff]
    %v459 = vld [vmem:[%s4 + $0x8] sm:$0xff]
    %v460 = vld [vmem:[%s4 + $0x10] sm:$0xff]
    %v461 = vld [vmem:[%s4 + $0x18] sm:$0xff]
    %v462 = vld [vmem:[%s5] sm:$0x1]
    %v464 = vlaneseq
    %v465 = vshrl.u32 %v464, 7
    %v466 = vsub.s32 0, %v465
    %v467 = vrot.slane %v462, %v466
    %vm471 = vcmask 1041409
    %v472 = vsel %vm471, %v457, %v428
    %v473 = vsel %vm399, %v472, 0
    %475 = vmatprep.subr.mxu0 0.0
    %476 = vmatpush1.msra.mxu0 %v458
    %477 = vmatprep.subr.mxu0 0.0
    %478 = vmatpush1.msra.mxu0 %v459
    %479 = vmatprep.subr.mxu0 0.0
    %480 = vmatpush1.msra.mxu0 %v460
    %481 = vmatprep.subr.mxu0 0.0
    %482 = vmatpush1.msra.mxu0 %v461
    %483 = vmatprep.subr.mxu0 0.0
    %484 = vmatpush1.msra.mxu0 0.0
    %485 = vmatprep.subr.mxu0 0.0
    %486 = vmatpush1.msra.mxu0 0.0
    %487 = vmatprep.subr.mxu0 0.0
    %488 = vmatpush1.msra.mxu0 0.0
    %489 = vmatprep.subr.mxu0 0.0
    %490 = vmatpush1.msra.mxu0 0.0
    %491 = vmatprep.subr.mxu0 0.0
    %492 = vmatpush1.msra.mxu0 0.0
    %493 = vmatprep.subr.mxu0 0.0
    %494 = vmatpush1.msra.mxu0 0.0
    %495 = vmatprep.subr.mxu0 0.0
    %496 = vmatpush1.msra.mxu0 0.0
    %497 = vmatprep.subr.mxu0 0.0
    %498 = vmatpush1.msra.mxu0 0.0
    %499 = vmatprep.subr.mxu0 0.0
    %500 = vmatpush1.msra.mxu0 0.0
    %501 = vmatprep.subr.mxu0 0.0
    %502 = vmatpush1.msra.mxu0 0.0
    %503 = vmatprep.subr.mxu0 0.0
    %504 = vmatpush1.msra.mxu0 0.0
    %505 = vmatprep.subr.mxu0 0.0
    %506 = vmatpush1.msra.mxu0 0.0
    %507 = vmatprep.subr.mxu0 0.0
    %508 = vmatpush1.msra.mxu0 0.0
    %509 = vmatprep.subr.mxu0 0.0
    %510 = vmatpush1.msra.mxu0 0.0
    %511 = vmatprep.subr.mxu0 0.0
    %512 = vmatpush1.msra.mxu0 0.0
    %513 = vmatprep.subr.mxu0 0.0
    %514 = vmatpush1.msra.mxu0 0.0
    %515 = vmatprep.subr.mxu0 0.0
    %516 = vmatpush1.msra.mxu0 0.0
    %517 = vmatprep.subr.mxu0 0.0
    %518 = vmatpush1.msra.mxu0 0.0
    %519 = vmatprep.subr.mxu0 0.0
    %520 = vmatpush1.msra.mxu0 0.0
    %521 = vmatprep.subr.mxu0 0.0
    %522 = vmatpush1.msra.mxu0 0.0
    %523 = vmatprep.subr.mxu0 0.0
    %524 = vmatpush1.msra.mxu0 0.0
    %525 = vmatprep.subr.mxu0 0.0
    %526 = vmatpush1.msra.mxu0 0.0
    %527 = vmatprep.subr.mxu0 0.0
    %528 = vmatpush1.msra.mxu0 0.0
    %529 = vmatprep.subr.mxu0 0.0
    %530 = vmatpush1.msra.mxu0 0.0
    %531 = vmatprep.subr.mxu0 0.0
    %532 = vmatpush1.msra.mxu0 0.0
    %533 = vmatprep.subr.mxu0 0.0
    %534 = vmatpush1.msra.mxu0 0.0
    %535 = vmatprep.subr.mxu0 0.0
    %536 = vmatpush1.msra.mxu0 0.0
    %537 = vmatprep.subr.mxu0 0.0
    %538 = vmatpush1.msra.mxu0 0.0
    %539 = vmatprep.mubr.f32.mxu0 0.0
    %540 = vmatmul.mubr.f32.gmra.mrb[0].mxu0 %v473
    %v541 = vpop.f32.mrb[0].mxu0
    %v542 = vadd.f32 %v467, %v541
    %v543 = vpop.f32.mrb[0].mxu0
    %544 = vdwg.mxu0
    %v545 = vmax.f32 %v542, 0.0
    %v546 = vld [vmem:[%s6] sm:$0x1f]
    %v547 = vld [vmem:[%s7] sm:$0x1]
    %v549 = vlaneseq
    %v550 = vshrl.u32 %v549, 7
    %v551 = vsub.s32 0, %v550
    %v552 = vrot.slane %v547, %v551
    %vm554 = vcmask 39936
    %v556 = vsel %vm554, %v545, 0
    %vm558 = vcmask 1044480
    %v560 = vsel %vm558, %v546, 0
    %562 = vmatprep.subr.mxu0 0.0
    %563 = vmatpush1.msra.mxu0 %v560
    %564 = vmatprep.subr.mxu0 0.0
    %565 = vmatpush1.msra.mxu0 0.0
    %566 = vmatprep.subr.mxu0 0.0
    %567 = vmatpush1.msra.mxu0 0.0
    %568 = vmatprep.subr.mxu0 0.0
    %569 = vmatpush1.msra.mxu0 0.0
    %570 = vmatprep.subr.mxu0 0.0
    %571 = vmatpush1.msra.mxu0 0.0
    %572 = vmatprep.subr.mxu0 0.0
    %573 = vmatpush1.msra.mxu0 0.0
    %574 = vmatprep.subr.mxu0 0.0
    %575 = vmatpush1.msra.mxu0 0.0
    %576 = vmatprep.subr.mxu0 0.0
    %577 = vmatpush1.msra.mxu0 0.0
    %578 = vmatprep.subr.mxu0 0.0
    %579 = vmatpush1.msra.mxu0 0.0
    %580 = vmatprep.subr.mxu0 0.0
    %581 = vmatpush1.msra.mxu0 0.0
    %582 = vmatprep.subr.mxu0 0.0
    %583 = vmatpush1.msra.mxu0 0.0
    %584 = vmatprep.subr.mxu0 0.0
    %585 = vmatpush1.msra.mxu0 0.0
    %586 = vmatprep.subr.mxu0 0.0
    %587 = vmatpush1.msra.mxu0 0.0
    %588 = vmatprep.subr.mxu0 0.0
    %589 = vmatpush1.msra.mxu0 0.0
    %590 = vmatprep.subr.mxu0 0.0
    %591 = vmatpush1.msra.mxu0 0.0
    %592 = vmatprep.subr.mxu0 0.0
    %593 = vmatpush1.msra.mxu0 0.0
    %594 = vmatprep.subr.mxu0 0.0
    %595 = vmatpush1.msra.mxu0 0.0
    %596 = vmatprep.subr.mxu0 0.0
    %597 = vmatpush1.msra.mxu0 0.0
    %598 = vmatprep.subr.mxu0 0.0
    %599 = vmatpush1.msra.mxu0 0.0
    %600 = vmatprep.subr.mxu0 0.0
    %601 = vmatpush1.msra.mxu0 0.0
    %602 = vmatprep.subr.mxu0 0.0
    %603 = vmatpush1.msra.mxu0 0.0
    %604 = vmatprep.subr.mxu0 0.0
    %605 = vmatpush1.msra.mxu0 0.0
    %606 = vmatprep.subr.mxu0 0.0
    %607 = vmatpush1.msra.mxu0 0.0
    %608 = vmatprep.subr.mxu0 0.0
    %609 = vmatpush1.msra.mxu0 0.0
    %610 = vmatprep.subr.mxu0 0.0
    %611 = vmatpush1.msra.mxu0 0.0
    %612 = vmatprep.subr.mxu0 0.0
    %613 = vmatpush1.msra.mxu0 0.0
    %614 = vmatprep.subr.mxu0 0.0
    %615 = vmatpush1.msra.mxu0 0.0
    %616 = vmatprep.subr.mxu0 0.0
    %617 = vmatpush1.msra.mxu0 0.0
    %618 = vmatprep.subr.mxu0 0.0
    %619 = vmatpush1.msra.mxu0 0.0
    %620 = vmatprep.subr.mxu0 0.0
    %621 = vmatpush1.msra.mxu0 0.0
    %622 = vmatprep.subr.mxu0 0.0
    %623 = vmatpush1.msra.mxu0 0.0
    %624 = vmatprep.subr.mxu0 0.0
    %625 = vmatpush1.msra.mxu0 0.0
    %626 = vmatprep.mubr.f32.mxu0 0.0
    %627 = vmatmul.mubr.f32.gmra.mrb[0].mxu0 %v556
    %v628 = vpop.f32.mrb[0].mxu0
    %v629 = vadd.f32 %v552, %v628
    %v630 = vpop.f32.mrb[0].mxu0
    %631 = vdwg.mxu0
    %vm632 = vcmask 74752
    %v633 = vsel %vm632, %v629, -inf
    %634 = vmax.xlane.f32.xlu0 %v633
    %v635 = vpop.xlane.xlu0 %634
    %v636 = vsub.f32 %v629, %v635
    %v637 = vmul.f32 %v636, 1.442695
    %v638 = vpow.pop %v637
    %v639 = vsel %vm632, %v638, 0.0
    %640 = vadd.xlane.f32.xlu0 %v639
    %v641 = vpop.xlane.xlu0 %640
    %v642 = vrcp.pop %v641
    %v643 = vmul.f32 %v638, %v642
    %644 = vst.msk [vmem:[#allocation2] sm:$0x3] %vm632, %v643
    // Predicated region
    $region34: #{custom_cnn_bk_forward.1} parent=1 // pred_check
      _
    $region35: #{custom_cnn_bk_forward.1} parent=1 // pred_check_branch
      %646 = sbr.rel (0) target = $region37
    $region36: #{custom_cnn_bk_forward.1} parent=1 // pred_region
      %s648 = ssub.s32 32, 32
      %649 = vsyncadd [#allocation3], %s648
      %s651 = sshll.u32 [#allocation2], 4
      %s652 = int_to_ptr.vmem [resolvable:$true] %s651
      %654 = dma.vmem_to_hbm [thread:$0]  %s652, 32, %s8, [#allocation3]
    $region37: #{custom_cnn_bk_forward.1} parent=1 // pred_fallthru
      _
    // Predicated region
    $region38: #{custom_cnn_bk_forward.1} parent=1 // pred_check
      _
    $region39: #{custom_cnn_bk_forward.1} parent=1 // pred_check_branch
      %656 = sbr.rel (0) target = $region41
    $region40: #{custom_cnn_bk_forward.1} parent=1 // pred_region
      %657 = dma.done [#allocation3], 32
    $region41: #{custom_cnn_bk_forward.1} parent=1 // pred_fallthru
      _
    %658 = vsyncpa [#allocation3], 1

</llo_original>
